<compile_context>
chip_gen: v5e
topology: v5e:2x2
jax: 0.10.0
libtpu: 0.0.40
codegen_flags: <defaults>
</compile_context>

<pallas_src>
import jax
import jax.numpy as jnp
import numpy as np
from jax.experimental import pallas as pl
from jax.experimental.pallas import tpu as pltpu


# ----------------------------------------------------------------------------
# Single fused kernel:
#   conv-as-GEMM + bias + ReLU  ->  Linear2(+BN2 folded) + ReLU
#   -> [Dropout = identity]     ->  Linear3(+BN3 folded) + ReLU
#   -> output layer as VPU multiply + lane reduction
# ----------------------------------------------------------------------------
def fused_kernel(x_ref, m_ref, b1_ref, w2_ref, b2_ref, w3_ref, b3_ref,
                 wo_ref, bo_ref, o_ref):
    # x_ref : (B, C_in*L)          m_ref : (C_in*L, l1)      b1_ref: (1, l1)
    # w2_ref: (l1, l2)  b2_ref: (1, l2)   w3_ref: (l2, l3)   b3_ref: (1, l3)
    # wo_ref: (1, l3)   bo_ref: (1, 1)    o_ref : (B, 1)
    a1 = jnp.maximum(
        jnp.dot(x_ref[...], m_ref[...], preferred_element_type=jnp.float32)
        + b1_ref[...], 0.0)                                   # conv + bias + ReLU
    h2 = jnp.maximum(
        jnp.dot(a1, w2_ref[...], preferred_element_type=jnp.float32)
        + b2_ref[...], 0.0)                                   # Linear2 + BN2(eval) + ReLU
    # TODO(synk): Dropout(p=0.25) is identity in eval mode; training-mode masking
    # would need pltpu.prng_random_bits.
    h3 = jnp.maximum(
        jnp.dot(h2, w3_ref[...], preferred_element_type=jnp.float32)
        + b3_ref[...], 0.0)                                   # Linear3 + BN3(eval) + ReLU
    # Output layer: 1-wide matmul replaced by VPU mul + lane (XLU) reduction.
    o_ref[...] = jnp.sum(h3 * wo_ref[...], axis=-1, keepdims=True) + bo_ref[...]


# ----------------------------------------------------------------------------
# One-time host-side parameter preparation (conv -> Toeplitz GEMM, BN folding,
# weight transposes). Called once, outside the per-forward path.
# ----------------------------------------------------------------------------
def prepare_params(params, C_in, L, K, eps=1e-5):
    Wc = params["conv_w"]                      # (C_out, C_in, K)
    C_out = Wc.shape[0]
    L_out = L - K + 1

    # Dense Toeplitz conv matrix M: (C_in*L, C_out*L_out) with
    #   M[c*L + i, o*L_out + l] = Wc[o, c, i-l]  if 0 <= i-l < K else 0
    # so (x.reshape(B, C_in*L) @ M)[b, o*L_out + l] == Conv1d(x)[b, o, l],
    # i.e. the matmul output is already in PyTorch's flatten order.
    i_idx = jnp.arange(L)
    l_idx = jnp.arange(L_out)
    j = i_idx[:, None] - l_idx[None, :]                     # (L, L_out)
    valid = (j >= 0) & (j < K)
    j_c = jnp.clip(j, 0, K - 1)
    w_cok = jnp.transpose(Wc, (1, 0, 2))                    # (C_in, C_out, K)
    M4 = jnp.where(valid[None, None, :, :], w_cok[:, :, j_c], 0.0)  # (C_in, C_out, L, L_out)
    conv_mat = jnp.transpose(M4, (0, 2, 1, 3)).reshape(C_in * L, C_out * L_out)
    conv_bias = jnp.repeat(params["conv_b"], L_out).reshape(1, C_out * L_out)

    # Eval-mode BatchNorm fold:  y = (xW^T + b)*s + t  =  x(W^T*s) + (b*s + t)
    s2 = params["bn2_gamma"] / jnp.sqrt(params["bn2_var"] + eps)
    t2 = params["bn2_beta"] - params["bn2_mean"] * s2
    s3 = params["bn3_gamma"] / jnp.sqrt(params["bn3_var"] + eps)
    t3 = params["bn3_beta"] - params["bn3_mean"] * s3

    w2f = params["w2"].T * s2[None, :]                      # (l1, l2)
    b2f = (params["b2"] * s2 + t2).reshape(1, -1)
    w3f = params["w3"].T * s3[None, :]                      # (l2, l3)
    b3f = (params["b3"] * s3 + t3).reshape(1, -1)
    wo = params["wo"].reshape(1, -1)                        # (1, l3)
    bo = params["bo"].reshape(1, 1)

    return {
        "conv_mat": conv_mat, "conv_bias": conv_bias,
        "w2": w2f, "b2": b2f, "w3": w3f, "b3": b3f,
        "wo": wo, "bo": bo,
    }


# ----------------------------------------------------------------------------
# Forward wrapper: one reshape of the input (free leading-dims merge) and one
# pallas_call. Everything resident in VMEM (tiny arrays, no grid needed).
# ----------------------------------------------------------------------------
def binary_classification_forward(x, prep):
    B = x.shape[0]
    x2 = x.reshape(B, -1)                                   # (B, C_in*L)

    vmem = pl.BlockSpec(memory_space=pltpu.MemorySpace.VMEM)
    args = (x2, prep["conv_mat"], prep["conv_bias"],
            prep["w2"], prep["b2"], prep["w3"], prep["b3"],
            prep["wo"], prep["bo"])
    return pl.pallas_call(
        fused_kernel,
        out_shape=jax.ShapeDtypeStruct((B, 1), jnp.float32),
        in_specs=[vmem] * len(args),
        out_specs=vmem,
    )(*args)


# ----------------------------------------------------------------------------
# Pure-JAX reference (same eval-mode semantics) for correctness checking.
# ----------------------------------------------------------------------------
def reference_forward(x, params):
    conv = jax.lax.conv_general_dilated(
        x, params["conv_w"], window_strides=(1,), padding="VALID",
        dimension_numbers=("NCH", "OIH", "NCH"))
    conv = conv + params["conv_b"][None, :, None]
    B = x.shape[0]
    h = jnp.maximum(conv.reshape(B, -1), 0.0)

    eps = 1e-5
    h = h @ params["w2"].T + params["b2"]
    h = (h - params["bn2_mean"]) / jnp.sqrt(params["bn2_var"] + eps) \
        * params["bn2_gamma"] + params["bn2_beta"]
    h = jnp.maximum(h, 0.0)
    h = h @ params["w3"].T + params["b3"]
    h = (h - params["bn3_mean"]) / jnp.sqrt(params["bn3_var"] + eps) \
        * params["bn3_gamma"] + params["bn3_beta"]
    h = jnp.maximum(h, 0.0)
    return h @ params["wo"].T + params["bo"]


def make_params(key, in_chan1, out_chan1, kernel_size1, l1, l2, l3):
    ks = jax.random.split(key, 8)
    u = lambda k, shape, scale: jax.random.uniform(
        k, shape, jnp.float32, -scale, scale)
    return {
        "conv_w": u(ks[0], (out_chan1, in_chan1, kernel_size1),
                    1.0 / np.sqrt(in_chan1 * kernel_size1)),
        "conv_b": u(ks[1], (out_chan1,), 1.0 / np.sqrt(in_chan1 * kernel_size1)),
        "w2": u(ks[2], (l2, l1), 1.0 / np.sqrt(l1)),
        "b2": u(ks[3], (l2,), 1.0 / np.sqrt(l1)),
        "w3": u(ks[4], (l3, l2), 1.0 / np.sqrt(l2)),
        "b3": u(ks[5], (l3,), 1.0 / np.sqrt(l2)),
        "wo": u(ks[6], (1, l3), 1.0 / np.sqrt(l3)),
        "bo": u(ks[7], (1,), 1.0 / np.sqrt(l3)),
        # BatchNorm parameters / running stats (PyTorch defaults).
        "bn2_gamma": jnp.ones((l2,), jnp.float32),
        "bn2_beta": jnp.zeros((l2,), jnp.float32),
        "bn2_mean": jnp.zeros((l2,), jnp.float32),
        "bn2_var": jnp.ones((l2,), jnp.float32),
        "bn3_gamma": jnp.ones((l3,), jnp.float32),
        "bn3_beta": jnp.zeros((l3,), jnp.float32),
        "bn3_mean": jnp.zeros((l3,), jnp.float32),
        "bn3_var": jnp.ones((l3,), jnp.float32),
    }


if __name__ == "__main__":
    # Shapes consistent with the module's forward:
    #   Conv1d(4 -> 8, kernel 3) on length-16 sequences  => L_out = 14
    #   flatten => l1 = 8 * 14 = 112, then l2 = 64, l3 = 32
    B, C_in, L = 2, 4, 16
    C_out, K = 8, 3
    L_out = L - K + 1
    l1, l2, l3 = C_out * L_out, 64, 32

    key = jax.random.PRNGKey(0)
    k_x, k_p = jax.random.split(key)
    x = jax.random.normal(k_x, (B, C_in, L), jnp.float32)   # NCL (PyTorch Conv1d layout)
    params = make_params(k_p, C_in, C_out, K, l1, l2, l3)

    prep = prepare_params(params, C_in, L, K)               # one-time host prep
    out = binary_classification_forward(x, prep)
    out = jax.block_until_ready(out)

    ref = reference_forward(x, params)
    np.testing.assert_allclose(np.asarray(out), np.asarray(ref),
                               rtol=1e-4, atol=1e-4)
    assert out.shape == (B, 1)
    print("KERNEL_OK")
</pallas_src>

<mosaic_0001>
module attributes {stable_mosaic.version = 11 : i64} {
  func.func @fused_kernel(%arg0: memref<2x64xf32, #tpu.memory_space<vmem>>, %arg1: memref<64x112xf32, #tpu.memory_space<vmem>>, %arg2: memref<1x112xf32, #tpu.memory_space<vmem>>, %arg3: memref<112x64xf32, #tpu.memory_space<vmem>>, %arg4: memref<1x64xf32, #tpu.memory_space<vmem>>, %arg5: memref<64x32xf32, #tpu.memory_space<vmem>>, %arg6: memref<1x32xf32, #tpu.memory_space<vmem>>, %arg7: memref<1x32xf32, #tpu.memory_space<vmem>>, %arg8: memref<1x1xf32, #tpu.memory_space<vmem>>, %arg9: memref<2x1xf32, #tpu.memory_space<vmem>>) attributes {dimension_semantics = [], scalar_prefetch = 0 : i64, scratch_operands = 0 : i64, tpu.core_type = #tpu.core_type<tc>} {
    %c0 = arith.constant 0 : index
    %c0_0 = arith.constant 0 : index
    %0 = vector.load %arg0[%c0, %c0_0] : memref<2x64xf32, #tpu.memory_space<vmem>>, vector<2x64xf32>
    %c0_1 = arith.constant 0 : index
    %c0_2 = arith.constant 0 : index
    %1 = vector.load %arg1[%c0_1, %c0_2] : memref<64x112xf32, #tpu.memory_space<vmem>>, vector<64x112xf32>
    %cst = arith.constant dense<0.000000e+00> : vector<2x112xf32>
    %2 = tpu.matmul %0, %1, %cst {dimension_numbers = #tpu.dot_dimension_numbers<[1], [0], [0], [1], [0, 0, 1, 1], [], []>} : vector<2x64xf32>, vector<64x112xf32>, vector<2x112xf32> -> vector<2x112xf32>
    %c0_3 = arith.constant 0 : index
    %c0_4 = arith.constant 0 : index
    %3 = vector.load %arg2[%c0_3, %c0_4] : memref<1x112xf32, #tpu.memory_space<vmem>>, vector<1x112xf32>
    %4 = vector.broadcast %3 : vector<1x112xf32> to vector<2x112xf32>
    %5 = arith.addf %2, %4 : vector<2x112xf32>
    %cst_5 = arith.constant 0.000000e+00 : f32
    %6 = vector.broadcast %cst_5 : f32 to vector<2x112xf32>
    %7 = arith.maximumf %5, %6 : vector<2x112xf32>
    %c0_6 = arith.constant 0 : index
    %c0_7 = arith.constant 0 : index
    %8 = vector.load %arg3[%c0_6, %c0_7] : memref<112x64xf32, #tpu.memory_space<vmem>>, vector<112x64xf32>
    %cst_8 = arith.constant dense<0.000000e+00> : vector<2x64xf32>
    %9 = tpu.matmul %7, %8, %cst_8 {dimension_numbers = #tpu.dot_dimension_numbers<[1], [0], [0], [1], [0, 0, 1, 1], [], []>} : vector<2x112xf32>, vector<112x64xf32>, vector<2x64xf32> -> vector<2x64xf32>
    %c0_9 = arith.constant 0 : index
    %c0_10 = arith.constant 0 : index
    %10 = vector.load %arg4[%c0_9, %c0_10] : memref<1x64xf32, #tpu.memory_space<vmem>>, vector<1x64xf32>
    %11 = vector.broadcast %10 : vector<1x64xf32> to vector<2x64xf32>
    %12 = arith.addf %9, %11 : vector<2x64xf32>
    %cst_11 = arith.constant 0.000000e+00 : f32
    %13 = vector.broadcast %cst_11 : f32 to vector<2x64xf32>
    %14 = arith.maximumf %12, %13 : vector<2x64xf32>
    %c0_12 = arith.constant 0 : index
    %c0_13 = arith.constant 0 : index
    %15 = vector.load %arg5[%c0_12, %c0_13] : memref<64x32xf32, #tpu.memory_space<vmem>>, vector<64x32xf32>
    %cst_14 = arith.constant dense<0.000000e+00> : vector<2x32xf32>
    %16 = tpu.matmul %14, %15, %cst_14 {dimension_numbers = #tpu.dot_dimension_numbers<[1], [0], [0], [1], [0, 0, 1, 1], [], []>} : vector<2x64xf32>, vector<64x32xf32>, vector<2x32xf32> -> vector<2x32xf32>
    %c0_15 = arith.constant 0 : index
    %c0_16 = arith.constant 0 : index
    %17 = vector.load %arg6[%c0_15, %c0_16] : memref<1x32xf32, #tpu.memory_space<vmem>>, vector<1x32xf32>
    %18 = vector.broadcast %17 : vector<1x32xf32> to vector<2x32xf32>
    %19 = arith.addf %16, %18 : vector<2x32xf32>
    %cst_17 = arith.constant 0.000000e+00 : f32
    %20 = vector.broadcast %cst_17 : f32 to vector<2x32xf32>
    %21 = arith.maximumf %19, %20 : vector<2x32xf32>
    %c0_18 = arith.constant 0 : index
    %c0_19 = arith.constant 0 : index
    %22 = vector.load %arg7[%c0_18, %c0_19] : memref<1x32xf32, #tpu.memory_space<vmem>>, vector<1x32xf32>
    %23 = vector.broadcast %22 : vector<1x32xf32> to vector<2x32xf32>
    %24 = arith.mulf %21, %23 : vector<2x32xf32>
    %cst_20 = arith.constant dense<0.000000e+00> : vector<2xf32>
    %25 = vector.multi_reduction <add>, %24, %cst_20 [1] : vector<2x32xf32> to vector<2xf32>
    %26 = vector.shape_cast %25 : vector<2xf32> to vector<2x1xf32>
    %c0_21 = arith.constant 0 : index
    %c0_22 = arith.constant 0 : index
    %27 = vector.load %arg8[%c0_21, %c0_22] : memref<1x1xf32, #tpu.memory_space<vmem>>, vector<1x1xf32>
    %28 = vector.broadcast %27 : vector<1x1xf32> to vector<2x1xf32>
    %29 = arith.addf %26, %28 : vector<2x1xf32>
    %c0_23 = arith.constant 0 : index
    %c0_24 = arith.constant 0 : index
    %30 = vector.load %arg9[%c0_23, %c0_24] : memref<2x1xf32, #tpu.memory_space<vmem>>, vector<2x1xf32>
    tpu.vector_store %arg9[%c0_23, %c0_24], %29 {strides = array<i32>} : memref<2x1xf32, #tpu.memory_space<vmem>>, vector<2x1xf32>,
    return
  }
}

</mosaic_0001>

<llo_original>
// kernel: tpu_custom_call.1
$region0: #{tpu_custom_call.1}
  #allocation0 [shape = 'u32[]', space=smem, size = 0x4, offset = 0x4, fixed_abs, tag = 'smem constant byte address 0x4 - core index']
  #allocation1 [shape = 'u32[72,128]{1,0:T(1,128)}', space=vmem, size = 0x9000, scoped, tag = 'internal scratch']
  #allocation2 [shape = 'f32[1,1]{1,0:T(1,128)S(1)}', space=vmem, size = 0x200, scoped, tag = 'scoped memory for tpu_custom_call.1']
  %s0 = inlined_call_operand.vmem [shape: f32[2,64], index: 0, kind: input, shape index: {}]
  %s1 = inlined_call_operand.vmem [shape: f32[64,112], index: 1, kind: input, shape index: {}]
  %s2 = inlined_call_operand.vmem [shape: f32[1,112], index: 2, kind: input, shape index: {}]
  %s3 = inlined_call_operand.vmem [shape: f32[112,64], index: 3, kind: input, shape index: {}]
  %s4 = inlined_call_operand.vmem [shape: f32[1,64], index: 4, kind: input, shape index: {}]
  %s5 = inlined_call_operand.vmem [shape: f32[64,32], index: 5, kind: input, shape index: {}]
  %s6 = inlined_call_operand.vmem [shape: f32[1,32], index: 6, kind: input, shape index: {}]
  %s7 = inlined_call_operand.vmem [shape: f32[1,32], index: 7, kind: input, shape index: {}]
  %s8 = inlined_call_operand.<no memory space> [shape: f32[1,1], index: 8, kind: input, shape index: {}]
  %s9 = inlined_call_operand.vmem [shape: f32[2,1], index: 9, kind: output, shape index: {}]
  %s10 = sld [smem:[#allocation0]]
  $region46: #{tpu_custom_call.1} parent=0
    _
  %s12 = ssub.s32 1, %s10
  %s13 = scalar_select 0, %s12, %s10
  %v14 = vstv %s8
  %15 = vst [vmem:[#allocation2] sm:$0x1] %v14
  // Predicated region
  $region2: #{tpu_custom_call.1} parent=0 // pred_check
    _
  $region3: #{tpu_custom_call.1} parent=0 // pred_check_branch
    %17 = sbr.rel (0) target = $region5
  $region4: #{tpu_custom_call.1} parent=0 // pred_region
    _
  $region5: #{tpu_custom_call.1} parent=0 // pred_fallthru
    _
  // Predicated region
  $region6: #{tpu_custom_call.1} parent=0 // pred_check
    _
  $region7: #{tpu_custom_call.1} parent=0 // pred_check_branch
    %19 = sbr.rel (0) target = $region9
  $region8: #{tpu_custom_call.1} parent=0 // pred_region
    _
  $region9: #{tpu_custom_call.1} parent=0 // pred_fallthru
    _
  // Predicated region
  $region10: #{tpu_custom_call.1} parent=0 // pred_check
    _
  $region11: #{tpu_custom_call.1} parent=0 // pred_check_branch
    %21 = sbr.rel (0) target = $region13
  $region12: #{tpu_custom_call.1} parent=0 // pred_region
    _
  $region13: #{tpu_custom_call.1} parent=0 // pred_fallthru
    _
  // Predicated region
  $region14: #{tpu_custom_call.1} parent=0 // pred_check
    _
  $region15: #{tpu_custom_call.1} parent=0 // pred_check_branch
    %23 = sbr.rel (0) target = $region17
  $region16: #{tpu_custom_call.1} parent=0 // pred_region
    _
  $region17: #{tpu_custom_call.1} parent=0 // pred_fallthru
    _
  // Predicated region
  $region18: #{tpu_custom_call.1} parent=0 // pred_check
    _
  $region19: #{tpu_custom_call.1} parent=0 // pred_check_branch
    %25 = sbr.rel (0) target = $region21
  $region20: #{tpu_custom_call.1} parent=0 // pred_region
    _
  $region21: #{tpu_custom_call.1} parent=0 // pred_fallthru
    _
  // Predicated region
  $region22: #{tpu_custom_call.1} parent=0 // pred_check
    _
  $region23: #{tpu_custom_call.1} parent=0 // pred_check_branch
    %27 = sbr.rel (0) target = $region25
  $region24: #{tpu_custom_call.1} parent=0 // pred_region
    _
  $region25: #{tpu_custom_call.1} parent=0 // pred_fallthru
    _
  // Predicated region
  $region26: #{tpu_custom_call.1} parent=0 // pred_check
    _
  $region27: #{tpu_custom_call.1} parent=0 // pred_check_branch
    %29 = sbr.rel (0) target = $region29
  $region28: #{tpu_custom_call.1} parent=0 // pred_region
    _
  $region29: #{tpu_custom_call.1} parent=0 // pred_fallthru
    _
  // Predicated region
  $region30: #{tpu_custom_call.1} parent=0 // pred_check
    _
  $region31: #{tpu_custom_call.1} parent=0 // pred_check_branch
    %31 = sbr.rel (0) target = $region33
  $region32: #{tpu_custom_call.1} parent=0 // pred_region
    _
  $region33: #{tpu_custom_call.1} parent=0 // pred_fallthru
    _
  // Predicated region
  $region34: #{tpu_custom_call.1} parent=0 // pred_check
    _
  $region35: #{tpu_custom_call.1} parent=0 // pred_check_branch
    %33 = sbr.rel (0) target = $region37
  $region36: #{tpu_custom_call.1} parent=0 // pred_region
    _
  $region37: #{tpu_custom_call.1} parent=0 // pred_fallthru
    _
  %v34 = vld [vmem:[%s0] sm:$0x3]
  %v35 = vld [vmem:[%s1] sm:$0xff]
  %v36 = vld [vmem:[%s1 + $0x8] sm:$0xff]
  %v37 = vld [vmem:[%s1 + $0x10] sm:$0xff]
  %v38 = vld [vmem:[%s1 + $0x18] sm:$0xff]
  %v39 = vld [vmem:[%s1 + $0x20] sm:$0xff]
  %v40 = vld [vmem:[%s1 + $0x28] sm:$0xff]
  %v41 = vld [vmem:[%s1 + $0x30] sm:$0xff]
  %v42 = vld [vmem:[%s1 + $0x38] sm:$0xff]
  %v43 = vld [vmem:[%s2] sm:$0x1]
  %v45 = vperm.slane %v43, 0
  %vm47 = vcmask 523264
  %v49 = vsel %vm47, %v34, 0
  %51 = vmatpush.msra.mxu0 0.0
  %52 = vmatpush.msra.mxu0 0.0
  %53 = vmatpush.msra.mxu0 0.0
  %54 = vmatpush.msra.mxu0 0.0
  %55 = vmatpush.msra.mxu0 0.0
  %56 = vmatpush.msra.mxu0 0.0
  %57 = vmatpush.msra.mxu0 0.0
  %58 = vmatpush.msra.mxu0 0.0
  %59 = vmatpush.msra.mxu0 %v42
  %60 = vmatpush.msra.mxu0 %v41
  %61 = vmatpush.msra.mxu0 %v40
  %62 = vmatpush.msra.mxu0 %v39
  %63 = vmatpush.msra.mxu0 %v38
  %64 = vmatpush.msra.mxu0 %v37
  %65 = vmatpush.msra.mxu0 %v36
  %66 = vmatpush.msra.mxu0 %v35
  %67 = vmatmul.f32.gmra.mxu0 %v49
  %v68 = vpop.f32.mrf.mxu0
  %v69 = vadd.f32 %v45, %v68
  %70 = vdwg.mxu0
  %v71 = vmax.f32 %v69, 0.0
  %v72 = vld [vmem:[%s3] sm:$0xff]
  %v73 = vld [vmem:[%s3 + $0x8] sm:$0xff]
  %v74 = vld [vmem:[%s3 + $0x10] sm:$0xff]
  %v75 = vld [vmem:[%s3 + $0x18] sm:$0xff]
  %v76 = vld [vmem:[%s3 + $0x20] sm:$0xff]
  %v77 = vld [vmem:[%s3 + $0x28] sm:$0xff]
  %v78 = vld [vmem:[%s3 + $0x30] sm:$0xff]
  %v79 = vld [vmem:[%s3 + $0x38] sm:$0xff]
  %v80 = vld [vmem:[%s3 + $0x40] sm:$0xff]
  %v81 = vld [vmem:[%s3 + $0x48] sm:$0xff]
  %v82 = vld [vmem:[%s3 + $0x50] sm:$0xff]
  %v83 = vld [vmem:[%s3 + $0x58] sm:$0xff]
  %v84 = vld [vmem:[%s3 + $0x60] sm:$0xff]
  %v85 = vld [vmem:[%s3 + $0x68] sm:$0xff]
  %v86 = vld [vmem:[%s4] sm:$0x1]
  %v88 = vperm.slane %v86, 0
  %vm90 = vcmask 916480
  %v92 = vsel %vm90, %v71, 0
  %94 = vmatpush.msra.mxu0 0.0
  %95 = vmatpush.msra.mxu0 0.0
  %96 = vmatpush.msra.mxu0 %v85
  %97 = vmatpush.msra.mxu0 %v84
  %98 = vmatpush.msra.mxu0 %v83
  %99 = vmatpush.msra.mxu0 %v82
  %100 = vmatpush.msra.mxu0 %v81
  %101 = vmatpush.msra.mxu0 %v80
  %102 = vmatpush.msra.mxu0 %v79
  %103 = vmatpush.msra.mxu0 %v78
  %104 = vmatpush.msra.mxu0 %v77
  %105 = vmatpush.msra.mxu0 %v76
  %106 = vmatpush.msra.mxu0 %v75
  %107 = vmatpush.msra.mxu0 %v74
  %108 = vmatpush.msra.mxu0 %v73
  %109 = vmatpush.msra.mxu0 %v72
  %110 = vmatmul.f32.gmra.mxu0 %v92
  %v111 = vpop.f32.mrf.mxu0
  %v112 = vadd.f32 %v88, %v111
  %113 = vdwg.mxu0
  %v114 = vmax.f32 %v112, 0.0
  %v115 = vld [vmem:[%s5] sm:$0xff]
  %v116 = vld [vmem:[%s5 + $0x8] sm:$0xff]
  %v117 = vld [vmem:[%s5 + $0x10] sm:$0xff]
  %v118 = vld [vmem:[%s5 + $0x18] sm:$0xff]
  %v119 = vld [vmem:[%s5 + $0x20] sm:$0xff]
  %v120 = vld [vmem:[%s5 + $0x28] sm:$0xff]
  %v121 = vld [vmem:[%s5 + $0x30] sm:$0xff]
  %v122 = vld [vmem:[%s5 + $0x38] sm:$0xff]
  %v123 = vld [vmem:[%s6] sm:$0x1]
  %v125 = vperm.slane %v123, 0
  %v128 = vsel %vm47, %v114, 0
  %130 = vmatpush.msra.mxu0 0.0
  %131 = vmatpush.msra.mxu0 0.0
  %132 = vmatpush.msra.mxu0 0.0
  %133 = vmatpush.msra.mxu0 0.0
  %134 = vmatpush.msra.mxu0 0.0
  %135 = vmatpush.msra.mxu0 0.0
  %136 = vmatpush.msra.mxu0 0.0
  %137 = vmatpush.msra.mxu0 0.0
  %138 = vmatpush.msra.mxu0 %v122
  %139 = vmatpush.msra.mxu0 %v121
  %140 = vmatpush.msra.mxu0 %v120
  %141 = vmatpush.msra.mxu0 %v119
  %142 = vmatpush.msra.mxu0 %v118
  %143 = vmatpush.msra.mxu0 %v117
  %144 = vmatpush.msra.mxu0 %v116
  %145 = vmatpush.msra.mxu0 %v115
  %146 = vmatmul.f32.gmra.mxu0 %v128
  %v147 = vpop.f32.mrf.mxu0
  %v148 = vadd.f32 %v125, %v147
  %149 = vdwg.mxu0
  %v150 = vmax.f32 %v148, 0.0
  %v151 = vld [vmem:[%s7] sm:$0x1]
  %v153 = vperm.slane %v151, 0
  %v155 = vmul.f32 %v150, %v153
  %vm156 = vcmask 254976
  %v157 = vsel %vm156, %v155, 0.0
  %158 = vadd.xlane.f32.xlu0 %v157
  %v159 = vpop.xlane.xlu0 %158
  %v160 = vld [vmem:[#allocation2] sm:$0x1]
  %v162 = vperm.slane %v160, 0
  %v164 = vadd.f32 %v159, %v162
  %vm165 = vcmask 1024
  %166 = vst.msk [vmem:[%s9] sm:$0x3] %vm165, %v164
  // Predicated region
  $region38: #{tpu_custom_call.1} parent=0 // pred_check
    _
  $region39: #{tpu_custom_call.1} parent=0 // pred_check_branch
    %168 = sbr.rel (0) target = $region41
  $region40: #{tpu_custom_call.1} parent=0 // pred_region
    _
  $region41: #{tpu_custom_call.1} parent=0 // pred_fallthru
    _
  // Predicated region
  $region42: #{tpu_custom_call.1} parent=0 // pred_check
    _
  $region43: #{tpu_custom_call.1} parent=0 // pred_check_branch
    %170 = sbr.rel (0) target = $region45
  $region44: #{tpu_custom_call.1} parent=0 // pred_region
    _
  $region45: #{tpu_custom_call.1} parent=0 // pred_fallthru
    _

</llo_original>
